<compile_context>
chip_gen: v6e
topology: v6e:2x2x1
jax: 0.10.0
libtpu: 0.0.40
codegen_flags: <defaults>
</compile_context>

<pallas_src>
import functools
import math

import jax
import jax.numpy as jnp
from jax.experimental import pallas as pl
from jax.experimental.pallas import tpu as pltpu

_EPS = float(jnp.finfo(jnp.float32).eps)
_LN2 = math.log(2.0)
_LANES = 128            # TPU lane width
_MAX_BLOCK_ROWS = 1024  # rows of 128 lanes per grid step (~3 MiB block data)


def _round_up(x, m):
    return ((x + m - 1) // m) * m


def _cdiv(a, b):
    return -(-a // b)


def _sa2mip_kernel(seed_ref, sa_ref, u_ref, mip_ref, w_ref, *,
                   hw, mipbias, mipnoise):
    # sa_ref: (TM, 128) f32, u_ref: (3, TM, 128) f32, outputs: (TM, 128) f32.
    sa = sa_ref[...]
    au = jnp.abs(u_ref[...])
    inf_norm = jnp.maximum(jnp.maximum(au[0], au[1]), au[2])   # 2 VPU maxes

    # Folded form of the reference math:
    #   saTexel = (1/inf_norm) / h / w
    #   mip = (sa - log(max(saTexel, eps))) / ln2 / 2 + mipbias
    #       = (sa + log(min(inf_norm*h*w, 1/eps))) / (2 ln2) + mipbias
    x = jnp.minimum(inf_norm * hw, 1.0 / _EPS)
    mip = (sa + jnp.log(x)) * (0.5 / _LN2) + mipbias

    if mipnoise != 0.0:
        # mipnoise * rand_like(saSample): uniform [0, 1) from the HW PRNG,
        # seeded from the caller-provided seed mixed with the block index.
        pltpu.prng_seed(seed_ref[0] + pl.program_id(0))
        bits = pltpu.bitcast(pltpu.prng_random_bits(sa.shape), jnp.uint32)
        fbits = (bits >> jnp.uint32(9)) | jnp.uint32(0x3F800000)
        uni = pltpu.bitcast(fbits, jnp.float32) - 1.0
        mip = mip + mipnoise * uni

    mip = jnp.maximum(mip, 0.0)           # .clip(0)
    mip_ref[...] = mip
    w_ref[...] = jnp.exp2(mip)            # 2 ** miplevel  (EUP)


@functools.partial(jax.jit,
                   static_argnames=("h", "wres", "mipbias", "mipnoise"))
def _sa2mip_impl(viewdirs, sa_sample, seed, *, h, wres, mipbias, mipnoise):
    out_shape = sa_sample.shape
    n = sa_sample.size
    sa = sa_sample.reshape(-1).astype(jnp.float32)
    u = viewdirs.reshape(-1, 3).astype(jnp.float32)

    # Block / grid layout: full (8,128) tiles, big blocks, and >= 2 parallel
    # grid steps whenever there is enough work (v7x has 2 TensorCores).
    m = max(_cdiv(n, _LANES), 1)
    if m <= 8:
        num_blocks = 1
    elif m <= 2 * _MAX_BLOCK_ROWS:
        num_blocks = 2
    else:
        num_blocks = _cdiv(m, _MAX_BLOCK_ROWS)
    tm = _round_up(_cdiv(m, num_blocks), 8)
    m_pad = tm * num_blocks
    n_pad = m_pad * _LANES

    pad = n_pad - n
    if pad:
        sa = jnp.concatenate([sa, jnp.zeros((pad,), jnp.float32)])
        u = jnp.concatenate([u, jnp.ones((pad, 3), jnp.float32)], axis=0)

    sa2 = sa.reshape(m_pad, _LANES)
    u3 = jnp.transpose(u).reshape(3, m_pad, _LANES)   # one fused XLA copy
    seed_arr = jnp.asarray(seed, jnp.int32).reshape((1,))

    kernel = functools.partial(
        _sa2mip_kernel, hw=float(h * wres), mipbias=float(mipbias),
        mipnoise=float(mipnoise))

    mip2, w2 = pl.pallas_call(
        kernel,
        out_shape=(jax.ShapeDtypeStruct((m_pad, _LANES), jnp.float32),
                   jax.ShapeDtypeStruct((m_pad, _LANES), jnp.float32)),
        grid_spec=pltpu.PrefetchScalarGridSpec(
            num_scalar_prefetch=1,
            grid=(num_blocks,),
            in_specs=[pl.BlockSpec((tm, _LANES), lambda i, s_ref: (i, 0)),
                      pl.BlockSpec((3, tm, _LANES),
                                   lambda i, s_ref: (0, i, 0))],
            out_specs=[pl.BlockSpec((tm, _LANES), lambda i, s_ref: (i, 0)),
                       pl.BlockSpec((tm, _LANES), lambda i, s_ref: (i, 0))]),
        compiler_params=pltpu.CompilerParams(
            dimension_semantics=("parallel",)),
    )(seed_arr, sa2, u3)

    mip = mip2.reshape(n_pad)[:n].reshape(out_shape)
    w = w2.reshape(n_pad)[:n].reshape(out_shape)
    return mip, w


class IntegralCubemapPallas:
    """JAX/Pallas port of the PyTorch IntegralCubemap module (forward only)."""

    def __init__(self, init_val, bg_resolution, mipbias=0.0, mipnoise=0.0):
        # nn.Parameter(init_val * ones((1, 6, R, R, 3))) -- deterministic init.
        self.bg_mat = init_val * jnp.ones(
            (1, 6, bg_resolution, bg_resolution, 3), jnp.float32)
        # tabularize_adjacencies() returns None in the reference.
        self.cache = None
        # mipbias / mipnoise are referenced but never set in the torch
        # __init__; define them deterministically here.
        self.mipbias = float(mipbias)
        self.mipnoise = float(mipnoise)

    def sa2mip(self, u, sa_sample, seed=0):
        h = self.bg_mat.shape[-2]
        wres = self.bg_mat.shape[-3]
        return _sa2mip_impl(u, sa_sample, seed, h=h, wres=wres,
                            mipbias=self.mipbias, mipnoise=self.mipnoise)

    def forward(self, viewdirs, sa_sample, max_level=None, seed=0):
        miplevel, w = self.sa2mip(viewdirs, sa_sample, seed=seed)
        # compute_adjacent_faces(viewdirs, w, cache) == zeros((N, 6)).
        adj = jnp.zeros((viewdirs.shape[0], 6), jnp.float32)
        # TODO(synk): torch forward() has no return statement; we return the
        # computed intermediates so the kernel work is observable.
        return miplevel, w, adj


def _reference_sa2mip(bg_mat, u, sa_sample, mipbias):
    h, wres = bg_mat.shape[-2], bg_mat.shape[-3]
    distortion = 1.0 / jnp.max(jnp.abs(u), axis=-1)
    sa_texel = distortion.reshape(sa_sample.shape) / h / wres
    mip = (sa_sample - jnp.log(jnp.maximum(sa_texel, _EPS))) / _LN2 / 2.0 + mipbias
    return jnp.maximum(mip, 0.0)


if __name__ == "__main__":
    key = jax.random.PRNGKey(0)
    k1, k2 = jax.random.split(key)

    N = 300                      # deliberately NOT a multiple of 128
    bg_resolution = 16
    module = IntegralCubemapPallas(init_val=0.5, bg_resolution=bg_resolution)

    viewdirs = jax.random.normal(k1, (N, 3), dtype=jnp.float32)
    viewdirs = viewdirs / jnp.linalg.norm(viewdirs, axis=-1, keepdims=True)
    sa_sample = jax.random.uniform(k2, (N,), dtype=jnp.float32,
                                   minval=-4.0, maxval=0.0)

    miplevel, w, adj = module.forward(viewdirs, sa_sample)
    jax.block_until_ready((miplevel, w, adj))

    # silent correctness check against a pure-JAX reference
    ref_mip = _reference_sa2mip(module.bg_mat, viewdirs, sa_sample,
                                module.mipbias)
    assert miplevel.shape == sa_sample.shape and w.shape == sa_sample.shape
    assert jnp.allclose(miplevel, ref_mip, atol=1e-5, rtol=1e-5)
    assert jnp.allclose(w, jnp.exp2(ref_mip), atol=1e-4, rtol=1e-4)
    assert adj.shape == (N, 6) and float(jnp.abs(adj).sum()) == 0.0

    print("KERNEL_OK")
</pallas_src>

<mosaic_0001>
module attributes {stable_mosaic.version = 11 : i64} {
  func.func @_sa2mip_kernel(%arg0: i32, %arg1: memref<1xi32, #tpu.memory_space<smem>>, %arg2: memref<8x128xf32, #tpu.memory_space<vmem>>, %arg3: memref<3x8x128xf32, #tpu.memory_space<vmem>>, %arg4: memref<8x128xf32, #tpu.memory_space<vmem>>, %arg5: memref<8x128xf32, #tpu.memory_space<vmem>>) attributes {dimension_semantics = [#tpu.dimension_semantics<parallel>], iteration_bounds = array<i64: 1>, scalar_prefetch = 1 : i64, scratch_operands = 0 : i64, tpu.core_type = #tpu.core_type<tc>, window_params = [{transform_indices = @transform_0, window_bounds = array<i64: 8, 128>}, {transform_indices = @transform_1, window_bounds = array<i64: 3, 8, 128>}, {transform_indices = @transform_2, window_bounds = array<i64: 8, 128>}, {transform_indices = @transform_3, window_bounds = array<i64: 8, 128>}]} {
    %c0 = arith.constant 0 : index
    %c0_0 = arith.constant 0 : index
    %0 = vector.load %arg2[%c0, %c0_0] : memref<8x128xf32, #tpu.memory_space<vmem>>, vector<8x128xf32>
    %c0_1 = arith.constant 0 : index
    %c0_2 = arith.constant 0 : index
    %c0_3 = arith.constant 0 : index
    %1 = vector.load %arg3[%c0_1, %c0_2, %c0_3] : memref<3x8x128xf32, #tpu.memory_space<vmem>>, vector<3x8x128xf32>
    %2 = math.absf %1 : vector<3x8x128xf32>
    %3 = vector.extract_strided_slice %2 {offsets = [0, 0, 0], sizes = [1, 8, 128], strides = [1, 1, 1]} : vector<3x8x128xf32> to vector<1x8x128xf32>
    %4 = vector.shape_cast %3 : vector<1x8x128xf32> to vector<8x128xf32>
    %5 = vector.extract_strided_slice %2 {offsets = [1, 0, 0], sizes = [1, 8, 128], strides = [1, 1, 1]} : vector<3x8x128xf32> to vector<1x8x128xf32>
    %6 = vector.shape_cast %5 : vector<1x8x128xf32> to vector<8x128xf32>
    %7 = arith.maximumf %4, %6 : vector<8x128xf32>
    %8 = vector.extract_strided_slice %2 {offsets = [2, 0, 0], sizes = [1, 8, 128], strides = [1, 1, 1]} : vector<3x8x128xf32> to vector<1x8x128xf32>
    %9 = vector.shape_cast %8 : vector<1x8x128xf32> to vector<8x128xf32>
    %10 = arith.maximumf %7, %9 : vector<8x128xf32>
    %cst = arith.constant 2.560000e+02 : f32
    %11 = vector.broadcast %cst : f32 to vector<8x128xf32>
    %12 = arith.mulf %10, %11 : vector<8x128xf32>
    %cst_4 = arith.constant 0x4B000000 : f32
    %13 = vector.broadcast %cst_4 : f32 to vector<8x128xf32>
    %14 = arith.minimumf %12, %13 : vector<8x128xf32>
    %15 = math.log %14 : vector<8x128xf32>
    %16 = arith.addf %0, %15 : vector<8x128xf32>
    %cst_5 = arith.constant 0.72134751 : f32
    %17 = vector.broadcast %cst_5 : f32 to vector<8x128xf32>
    %18 = arith.mulf %16, %17 : vector<8x128xf32>
    %cst_6 = arith.constant 0.000000e+00 : f32
    %19 = vector.broadcast %cst_6 : f32 to vector<8x128xf32>
    %20 = arith.addf %18, %19 : vector<8x128xf32>
    %cst_7 = arith.constant 0.000000e+00 : f32
    %21 = vector.broadcast %cst_7 : f32 to vector<8x128xf32>
    %22 = arith.maximumf %20, %21 : vector<8x128xf32>
    %c0_8 = arith.constant 0 : index
    %c0_9 = arith.constant 0 : index
    %23 = vector.load %arg4[%c0_8, %c0_9] : memref<8x128xf32, #tpu.memory_space<vmem>>, vector<8x128xf32>
    tpu.vector_store %arg4[%c0_8, %c0_9], %22 {strides = array<i32>} : memref<8x128xf32, #tpu.memory_space<vmem>>, vector<8x128xf32>,
    %24 = math.exp2 %22 : vector<8x128xf32>
    %c0_10 = arith.constant 0 : index
    %c0_11 = arith.constant 0 : index
    %25 = vector.load %arg5[%c0_10, %c0_11] : memref<8x128xf32, #tpu.memory_space<vmem>>, vector<8x128xf32>
    tpu.vector_store %arg5[%c0_10, %c0_11], %24 {strides = array<i32>} : memref<8x128xf32, #tpu.memory_space<vmem>>, vector<8x128xf32>,
    return
  }
  func.func @transform_0(%arg0: i32, %arg1: memref<1xi32, #tpu.memory_space<smem>>) -> (i32, i32) {
    %c0_i32 = arith.constant 0 : i32
    %c0_i32_0 = arith.constant 0 : i32
    return %arg0, %c0_i32 : i32, i32
  }
  func.func @transform_1(%arg0: i32, %arg1: memref<1xi32, #tpu.memory_space<smem>>) -> (i32, i32, i32) {
    %c0_i32 = arith.constant 0 : i32
    %c0_i32_0 = arith.constant 0 : i32
    %c0_i32_1 = arith.constant 0 : i32
    return %c0_i32, %arg0, %c0_i32_0 : i32, i32, i32
  }
  func.func @transform_2(%arg0: i32, %arg1: memref<1xi32, #tpu.memory_space<smem>>) -> (i32, i32) {
    %c0_i32 = arith.constant 0 : i32
    %c0_i32_0 = arith.constant 0 : i32
    return %arg0, %c0_i32 : i32, i32
  }
  func.func @transform_3(%arg0: i32, %arg1: memref<1xi32, #tpu.memory_space<smem>>) -> (i32, i32) {
    %c0_i32 = arith.constant 0 : i32
    %c0_i32_0 = arith.constant 0 : i32
    return %arg0, %c0_i32 : i32, i32
  }
}

</mosaic_0001>

<llo_original>
// kernel: _sa2mip_impl.1
$region0: #{_sa2mip_impl.1}
  #allocation0 [shape = 'u32[]', space=smem, size = 0x4, offset = 0x4, fixed_abs, tag = 'smem constant byte address 0x4 - core index']
  #allocation1 [shape = 'u32[144,128]{1,0:T(1,128)}', space=vmem, size = 0x12000, scoped, tag = 'internal scratch']
  #allocation2 [shape = 's32[1]{0}', space=sflag, size = 0x4, scoped, tag = 'scoped memory for _sa2mip_impl.1']
  #allocation3 [shape = 's32[1]{0:T(128)S(6)}', space=smem, size = 0x200, scoped, tag = 'prefetched SMEM operand 0']
  %s0 = inlined_call_operand.<no memory space> [shape: s32[1], index: 0, kind: input, shape index: {}]
  %s1 = inlined_call_operand.vmem [shape: f32[8,128], index: 1, kind: input, shape index: {}]
  %s2 = inlined_call_operand.vmem [shape: f32[3,8,128], index: 2, kind: input, shape index: {}]
  %s3 = inlined_call_operand.vmem [shape: f32[8,128], index: 3, kind: output, shape index: {0}]
  %s4 = inlined_call_operand.vmem [shape: f32[8,128], index: 4, kind: output, shape index: {1}]
  %5 = xla_tuple %s3, %s4
  %s6 = sld [smem:[#allocation0]]
  $region26: #{_sa2mip_impl.1} parent=0
    _
  %s8 = ssub.s32 1, %s6
  %s9 = scalar_select 0, %s8, %s6
  %10 = sst [smem:[#allocation3]] %s0
  // Predicated region
  $region2: #{_sa2mip_impl.1} parent=0 // pred_check
    _
  $region3: #{_sa2mip_impl.1} parent=0 // pred_check_branch
    %12 = sbr.rel (0) target = $region5
  $region4: #{_sa2mip_impl.1} parent=0 // pred_region
    _
  $region5: #{_sa2mip_impl.1} parent=0 // pred_fallthru
    _
  // Predicated region
  $region6: #{_sa2mip_impl.1} parent=0 // pred_check
    _
  $region7: #{_sa2mip_impl.1} parent=0 // pred_check_branch
    %14 = sbr.rel (0) target = $region9
  $region8: #{_sa2mip_impl.1} parent=0 // pred_region
    _
  $region9: #{_sa2mip_impl.1} parent=0 // pred_fallthru
    _
  %v15 = vld [vmem:[%s1] sm:$0xff]
  %v16 = vld [vmem:[%s2] sm:$0xff]
  %v17 = vld [vmem:[%s2 + $0x8] sm:$0xff]
  %v18 = vld [vmem:[%s2 + $0x10] sm:$0xff]
  %v19 = vand.u32 2147483647, %v16
  %v20 = vand.u32 2147483647, %v17
  %v21 = vand.u32 2147483647, %v18
  %v22 = vmax.f32 %v19, %v20
  %v23 = vmax.f32 %v22, %v21
  %v24 = vmul.f32 %v23, 256.0
  %v25 = vmin.f32 %v24, 8388608.0
  %v26 = vlog2.pop %v25
  %v27 = vmul.f32 %v26, 0.6931472
  %v28 = vadd.f32 %v15, %v27
  %v29 = vmul.f32 %v28, 0.7213475
  %v30 = vadd.f32 %v29, 0.0
  %v31 = vmax.f32 %v30, 0.0
  %32 = vst [vmem:[%s3] sm:$0xff] %v31
  %v33 = vpow.pop %v31
  %34 = vst [vmem:[%s4] sm:$0xff] %v33
  // Predicated region
  $region10: #{_sa2mip_impl.1} parent=0 // pred_check
    _
  $region11: #{_sa2mip_impl.1} parent=0 // pred_check_branch
    %36 = sbr.rel (0) target = $region13
  $region12: #{_sa2mip_impl.1} parent=0 // pred_region
    _
  $region13: #{_sa2mip_impl.1} parent=0 // pred_fallthru
    _
  // Predicated region
  $region14: #{_sa2mip_impl.1} parent=0 // pred_check
    _
  $region15: #{_sa2mip_impl.1} parent=0 // pred_check_branch
    %38 = sbr.rel (0) target = $region17
  $region16: #{_sa2mip_impl.1} parent=0 // pred_region
    _
  $region17: #{_sa2mip_impl.1} parent=0 // pred_fallthru
    _
  // Predicated region
  $region18: #{_sa2mip_impl.1} parent=0 // pred_check
    _
  $region19: #{_sa2mip_impl.1} parent=0 // pred_check_branch
    %40 = sbr.rel (0) target = $region21
  $region20: #{_sa2mip_impl.1} parent=0 // pred_region
    _
  $region21: #{_sa2mip_impl.1} parent=0 // pred_fallthru
    _
  // Predicated region
  $region22: #{_sa2mip_impl.1} parent=0 // pred_check
    _
  $region23: #{_sa2mip_impl.1} parent=0 // pred_check_branch
    %42 = sbr.rel (0) target = $region25
  $region24: #{_sa2mip_impl.1} parent=0 // pred_region
    _
  $region25: #{_sa2mip_impl.1} parent=0 // pred_fallthru
    _

</llo_original>
